<compile_context>
chip_gen: v7x
topology: tpu7x:2x2x1
jax: 0.10.0
libtpu: 0.0.40
codegen_flags: <defaults>
</compile_context>

<pallas_src>
import functools

import jax
import jax.numpy as jnp
from jax.experimental import pallas as pl
from jax.experimental.pallas import tpu as pltpu

n_embd = 64
head_size = 16
block_size = 32
dropout = 0.0  # dropout == 0.0 -> identity; no RNG needed.
# TODO(synk): nonzero dropout would need pltpu.prng_seed / pltpu.stateful_bernoulli.


def head_kernel(x_ref, w_ref, o_ref, *, compute_dtype, approx_recip):
    # x_ref: (bb, T, C) in compute_dtype
    # w_ref: (C, 3H) in compute_dtype, columns are [key | query | value]
    # o_ref: (bb, T, H) float32
    bb, T, C = x_ref.shape
    H = w_ref.shape[1] // 3

    x = x_ref[...]
    w = w_ref[...]

    # One fused projection matmul over all batch rows of the block: (bb*T, C) @ (C, 3H)
    kqv = jnp.dot(x.reshape(bb * T, C), w,
                  preferred_element_type=jnp.float32).reshape(bb, T, 3 * H)
    k = kqv[:, :, 0 * H:1 * H]
    q = kqv[:, :, 1 * H:2 * H]
    v = kqv[:, :, 2 * H:3 * H]

    # wei = q @ k^T * C**-0.5   (module scales by C = n_embd, not head_size -- intentional)
    scale = jnp.float32(C) ** -0.5
    wei = jax.lax.dot_general(
        q.astype(compute_dtype), k.astype(compute_dtype),
        dimension_numbers=(((2,), (2,)), ((0,), (0,))),
        preferred_element_type=jnp.float32) * scale          # (bb, T, T)

    # Causal mask. -inf is safe here because the diagonal is always unmasked
    # (every row has at least one finite score).
    row = jax.lax.broadcasted_iota(jnp.int32, (bb, T, T), 1)
    col = jax.lax.broadcasted_iota(jnp.int32, (bb, T, T), 2)
    wei = jnp.where(col <= row, wei, -jnp.inf)

    # Numerically stable softmax, kept in f32 (v5e has no bf16 VPU/EUP).
    wei = wei - jnp.max(wei, axis=-1, keepdims=True)
    p = jnp.exp(wei)
    p = p * pl.reciprocal(jnp.sum(p, axis=-1, keepdims=True), approx=approx_recip)

    # out = wei @ v  (batched over the block's batch rows)
    o_ref[...] = jax.lax.dot_general(
        p.astype(compute_dtype), v.astype(compute_dtype),
        dimension_numbers=(((2,), (1,)), ((0,), (0,))),
        preferred_element_type=jnp.float32)


def head_forward(x, w_key, w_query, w_value, *,
                 compute_dtype=jnp.bfloat16, batch_block=None):
    """x: (B, T, C) float32; weights: (C, head_size) float32.

    compute_dtype: dtype fed to the MXU (bfloat16 = v6e/v7x fast path, float32 = exact).
    Softmax / masking always run in float32.
    """
    B, T, C = x.shape
    H = w_key.shape[1]

    # Fuse the three projection weights into one (C, 3H) operand: [k | q | v].
    w_kqv = jnp.concatenate([w_key, w_query, w_value], axis=1).astype(compute_dtype)
    x_c = x.astype(compute_dtype)

    if batch_block is None:
        # Keep >=2 grid steps when B is even so v7x's two TensorCores both get work,
        # while still packing several batch rows into one block (less per-step overhead).
        batch_block = B // 2 if (B >= 2 and B % 2 == 0) else B
    assert B % batch_block == 0, "batch_block must divide B"
    grid = (B // batch_block,)

    kernel = functools.partial(
        head_kernel,
        compute_dtype=compute_dtype,
        approx_recip=(compute_dtype != jnp.float32))

    return pl.pallas_call(
        kernel,
        out_shape=jax.ShapeDtypeStruct((B, T, H), jnp.float32),
        grid_spec=pltpu.PrefetchScalarGridSpec(
            num_scalar_prefetch=0,
            grid=grid,
            in_specs=[
                pl.BlockSpec((batch_block, T, C), lambda b: (b, 0, 0)),
                pl.BlockSpec((C, 3 * H), lambda b: (0, 0)),
            ],
            out_specs=pl.BlockSpec((batch_block, T, H), lambda b: (b, 0, 0)),
        ),
        compiler_params=pltpu.CompilerParams(
            dimension_semantics=("parallel",)),
    )(x_c, w_kqv)


def reference_forward(x, w_key, w_query, w_value):
    """Pure-JAX f32 reference mirroring the PyTorch forward."""
    B, T, C = x.shape
    k = x @ w_key
    q = x @ w_query
    v = x @ w_value
    wei = (q @ jnp.swapaxes(k, -2, -1)) * (C ** -0.5)
    tril = jnp.tril(jnp.ones((T, T), dtype=bool))
    wei = jnp.where(tril, wei, -jnp.inf)
    wei = jax.nn.softmax(wei, axis=-1)
    return wei @ v


if __name__ == "__main__":
    key = jax.random.PRNGKey(0)
    kx, kk, kq, kv = jax.random.split(key, 4)

    B, T, C = 2, 8, n_embd  # T <= block_size
    x = jax.random.normal(kx, (B, T, C), dtype=jnp.float32)

    # Deterministic parameter init (nn.Linear-style uniform bound 1/sqrt(C)).
    bound = 1.0 / (C ** 0.5)
    w_key = jax.random.uniform(kk, (C, head_size), jnp.float32, -bound, bound)
    w_query = jax.random.uniform(kq, (C, head_size), jnp.float32, -bound, bound)
    w_value = jax.random.uniform(kv, (C, head_size), jnp.float32, -bound, bound)

    ref = reference_forward(x, w_key, w_query, w_value)

    # Exact f32 path: tight correctness check.
    out_f32 = head_forward(x, w_key, w_query, w_value, compute_dtype=jnp.float32)
    out_f32 = jax.block_until_ready(out_f32)
    assert out_f32.shape == (B, T, head_size)
    assert jnp.allclose(out_f32, ref, atol=1e-5, rtol=1e-5), "f32 mismatch vs reference"

    # bf16 MXU fast path (v6e/v7x): looser tolerance for bf16 matmul operands.
    out_bf16 = head_forward(x, w_key, w_query, w_value, compute_dtype=jnp.bfloat16)
    out_bf16 = jax.block_until_ready(out_bf16)
    assert out_bf16.shape == (B, T, head_size)
    assert jnp.allclose(out_bf16, ref, atol=2e-2, rtol=2e-2), "bf16 mismatch vs reference"

    print("KERNEL_OK")
</pallas_src>

<mosaic_0001>
module attributes {stable_mosaic.version = 11 : i64} {
  func.func @head_kernel(%arg0: i32, %arg1: memref<1x8x64xf32, #tpu.memory_space<vmem>>, %arg2: memref<64x48xf32, #tpu.memory_space<vmem>>, %arg3: memref<1x8x16xf32, #tpu.memory_space<vmem>>) attributes {dimension_semantics = [#tpu.dimension_semantics<parallel>], iteration_bounds = array<i64: 2>, scalar_prefetch = 0 : i64, scratch_operands = 0 : i64, tpu.core_type = #tpu.core_type<tc>, window_params = [{transform_indices = @transform_0, window_bounds = array<i64: 1, 8, 64>}, {pipeline_mode = #tpu.pipeline_mode<synchronous>, transform_indices = @transform_1, window_bounds = array<i64: 64, 48>}, {transform_indices = @transform_2, window_bounds = array<i64: 1, 8, 16>}]} {
    %c0 = arith.constant 0 : index
    %c0_0 = arith.constant 0 : index
    %c0_1 = arith.constant 0 : index
    %0 = vector.load %arg1[%c0, %c0_0, %c0_1] : memref<1x8x64xf32, #tpu.memory_space<vmem>>, vector<1x8x64xf32>
    %c0_2 = arith.constant 0 : index
    %c0_3 = arith.constant 0 : index
    %1 = vector.load %arg2[%c0_2, %c0_3] : memref<64x48xf32, #tpu.memory_space<vmem>>, vector<64x48xf32>
    %2 = vector.shape_cast %0 : vector<1x8x64xf32> to vector<8x64xf32>
    %cst = arith.constant dense<0.000000e+00> : vector<8x48xf32>
    %3 = tpu.matmul %2, %1, %cst {dimension_numbers = #tpu.dot_dimension_numbers<[1], [0], [0], [1], [0, 0, 1, 1], [], []>} : vector<8x64xf32>, vector<64x48xf32>, vector<8x48xf32> -> vector<8x48xf32>
    %4 = vector.shape_cast %3 : vector<8x48xf32> to vector<1x8x48xf32>
    %5 = vector.extract_strided_slice %4 {offsets = [0, 0, 0], sizes = [1, 8, 16], strides = [1, 1, 1]} : vector<1x8x48xf32> to vector<1x8x16xf32>
    %6 = vector.extract_strided_slice %4 {offsets = [0, 0, 16], sizes = [1, 8, 16], strides = [1, 1, 1]} : vector<1x8x48xf32> to vector<1x8x16xf32>
    %7 = vector.extract_strided_slice %4 {offsets = [0, 0, 32], sizes = [1, 8, 16], strides = [1, 1, 1]} : vector<1x8x48xf32> to vector<1x8x16xf32>
    %cst_4 = arith.constant 6.400000e+01 : f32
    %cst_5 = arith.constant -5.000000e-01 : f32
    %8 = math.powf %cst_4, %cst_5 : f32
    %cst_6 = arith.constant dense<0.000000e+00> : vector<1x8x8xf32>
    %9 = tpu.matmul %6, %5, %cst_6 {dimension_numbers = #tpu.dot_dimension_numbers<[2], [2], [1], [1], [0, 0, 0, 1, 1, 1], [0], [0]>} : vector<1x8x16xf32>, vector<1x8x16xf32>, vector<1x8x8xf32> -> vector<1x8x8xf32>
    %10 = vector.broadcast %8 : f32 to vector<1x8x8xf32>
    %11 = arith.mulf %9, %10 : vector<1x8x8xf32>
    %12 = tpu.iota {dimensions = array<i32: 1>} : vector<1x8x8xi32>
    %13 = tpu.iota {dimensions = array<i32: 2>} : vector<1x8x8xi32>
    %14 = arith.cmpi sle, %13, %12 : vector<1x8x8xi32>
    %cst_7 = arith.constant 0xFF800000 : f32
    %15 = vector.broadcast %cst_7 : f32 to vector<1x8x8xf32>
    %16 = arith.select %14, %11, %15 : vector<1x8x8xi1>, vector<1x8x8xf32>
    %cst_8 = arith.constant dense<0xFF800000> : vector<1x8xf32>
    %17 = vector.multi_reduction <maximumf>, %16, %cst_8 [2] : vector<1x8x8xf32> to vector<1x8xf32>
    %18 = vector.shape_cast %17 : vector<1x8xf32> to vector<1x8x1xf32>
    %19 = vector.broadcast %18 : vector<1x8x1xf32> to vector<1x8x8xf32>
    %20 = arith.subf %16, %19 : vector<1x8x8xf32>
    %21 = math.exp %20 : vector<1x8x8xf32>
    %cst_9 = arith.constant dense<0.000000e+00> : vector<1x8xf32>
    %22 = vector.multi_reduction <add>, %21, %cst_9 [2] : vector<1x8x8xf32> to vector<1x8xf32>
    %23 = vector.shape_cast %22 : vector<1x8xf32> to vector<1x8x1xf32>
    %24 = tpu.reciprocal %23 : vector<1x8x1xf32> -> vector<1x8x1xf32>
    %25 = vector.broadcast %24 : vector<1x8x1xf32> to vector<1x8x8xf32>
    %26 = arith.mulf %21, %25 : vector<1x8x8xf32>
    %cst_10 = arith.constant dense<0.000000e+00> : vector<1x8x16xf32>
    %27 = tpu.matmul %26, %7, %cst_10 {dimension_numbers = #tpu.dot_dimension_numbers<[2], [1], [1], [2], [0, 0, 0, 1, 1, 2], [0], [0]>} : vector<1x8x8xf32>, vector<1x8x16xf32>, vector<1x8x16xf32> -> vector<1x8x16xf32>
    %c0_11 = arith.constant 0 : index
    %c0_12 = arith.constant 0 : index
    %c0_13 = arith.constant 0 : index
    %28 = vector.load %arg3[%c0_11, %c0_12, %c0_13] : memref<1x8x16xf32, #tpu.memory_space<vmem>>, vector<1x8x16xf32>
    tpu.vector_store %arg3[%c0_11, %c0_12, %c0_13], %27 {strides = array<i32>} : memref<1x8x16xf32, #tpu.memory_space<vmem>>, vector<1x8x16xf32>,
    return
  }
  func.func @transform_0(%arg0: i32) -> (i32, i32, i32) {
    %c0_i32 = arith.constant 0 : i32
    %c0_i32_0 = arith.constant 0 : i32
    %c0_i32_1 = arith.constant 0 : i32
    return %arg0, %c0_i32, %c0_i32_0 : i32, i32, i32
  }
  func.func @transform_1(%arg0: i32) -> (i32, i32) {
    %c0_i32 = arith.constant 0 : i32
    %c0_i32_0 = arith.constant 0 : i32
    %c0_i32_1 = arith.constant 0 : i32
    return %c0_i32, %c0_i32_0 : i32, i32
  }
  func.func @transform_2(%arg0: i32) -> (i32, i32, i32) {
    %c0_i32 = arith.constant 0 : i32
    %c0_i32_0 = arith.constant 0 : i32
    %c0_i32_1 = arith.constant 0 : i32
    return %arg0, %c0_i32, %c0_i32_0 : i32, i32, i32
  }
}

</mosaic_0001>

<llo_original>
// kernel: tpu_custom_call.1
$region0: #{tpu_custom_call.1}
  #allocation0 [shape = 'u32[]', space=smem, size = 0x4, offset = 0x4, fixed_abs, tag = 'smem constant byte address 0x4 - core index']
  #allocation1 [shape = 'u32[144,128]{1,0:T(1,128)}', space=vmem, size = 0x12000, scoped, tag = 'internal scratch']
  %s0 = inlined_call_operand.vmem [shape: f32[2,8,64], index: 0, kind: input, shape index: {}]
  %s1 = inlined_call_operand.vmem [shape: f32[64,48], index: 1, kind: input, shape index: {}]
  %s2 = inlined_call_operand.hbm [shape: f32[2,8,16], index: 2, kind: output, shape index: {}]
  %s3 = sld [smem:[#allocation0]]
  $region41: #{tpu_custom_call.1} parent=0
    _
  %s5 = ssub.s32 1, %s3
  %s6 = scalar_select 0, %s5, %s3
  $region1: #{tpu_custom_call.1} parent=0
    #allocation2 [shape = 'u8[8192]{0}', space=vmem, size = 0x2000, scoped, tag = 'output window, operand 0']
    #allocation3 [shape = 's32[2]{0}', space=sflag, size = 0x8, scoped, tag = 'scoped memory for tpu_custom_call.1']
    %7 = vsyncpa [#allocation3], 0
    %s8 = scalar_lea.sflag [#allocation3], 1
    %9 = vsyncpa %s8, 0
    loop: start=0, step=1, limit=4
    $region2: #{tpu_custom_call.1} parent=1 // loop_pre_header
      _
    $region3: #{tpu_custom_call.1} parent=1 // loop_header
      %s11 = sphi 0, %s15
      %p12 = scmp.ge.s32.totalorder %s11, 4
      %s21 = sphi 0, %s23
      %s24 = sphi 0, %s21
      %s25 = sphi 0, %s24
      %s41 = sphi 0, %s25
      %s45 = sphi 0, %s45
      %s47 = sphi 0, %s45
      %s48 = sphi 0, %s47
      %s62 = sphi 0, %s48
      %s68 = sphi 0, %s70
      %s71 = sphi 0, %s68
      %s72 = sphi 0, %s71
      %s88 = sphi 0, %s72
    $region4: #{tpu_custom_call.1} parent=1 // loop_header_branch
      %14 = sbr.rel (%p12) target = $region8
    $region5: #{tpu_custom_call.1} parent=1 // loop_body
      %s16 = ssub.s32 %s11, 1
      %s17 = ssub.s32 %s11, 2
      %s18 = sadd.s32 %s11, 1
      %s19 = ssub.s32 %s11, %s18
      %p20 = scmp.eq.s32.totalorder %s19, 0
      %s22 = sadd.s32 %s21, 1
      %s23 = scalar_select %p20, %s21, %s22
      %p26 = pneg %p20
      %p27 = scmp.eq.s32.totalorder %s11, 1
      %p28 = por %p26, %p27
      %p29 = scmp.ne.s32.totalorder %s21, %s24
      %p30 = scmp.eq.s32.totalorder %s11, 0
      %p31 = por %p29, %p30
      %p32 = scmp.ne.s32.totalorder %s21, %s24
      %p33 = scmp.eq.s32.totalorder %s16, 1
      %p34 = por %p32, %p33
      %p35 = scmp.ne.s32.totalorder %s24, %s25
      %p36 = scmp.eq.s32.totalorder %s16, 0
      %p37 = por %p35, %p36
      %p38 = scmp.ne.s32.totalorder %s24, %s25
      %p39 = scmp.eq.s32.totalorder %s17, 1
      %p40 = por %p38, %p39
      %p42 = scmp.ne.s32.totalorder %s25, %s41
      %p43 = scmp.eq.s32.totalorder %s17, 0
      %p44 = por %p42, %p43
      %s46 = sadd.s32 %s45, 1
      %p49 = scmp.eq.s32.totalorder %s11, 1
      %p50 = scmp.ne.s32.totalorder %s45, %s47
      %p51 = scmp.eq.s32.totalorder %s11, 0
      %p52 = por %p50, %p51
      %p53 = scmp.ne.s32.totalorder %s45, %s47
      %p54 = scmp.eq.s32.totalorder %s16, 1
      %p55 = por %p53, %p54
      %p56 = scmp.ne.s32.totalorder %s47, %s48
      %p57 = scmp.eq.s32.totalorder %s16, 0
      %p58 = por %p56, %p57
      %p59 = scmp.ne.s32.totalorder %s47, %s48
      %p60 = scmp.eq.s32.totalorder %s17, 1
      %p61 = por %p59, %p60
      %p63 = scmp.ne.s32.totalorder %s48, %s62
      %p64 = scmp.eq.s32.totalorder %s17, 0
      %p65 = por %p63, %p64
      %s66 = ssub.s32 %s11, %s18
      %p67 = scmp.eq.s32.totalorder %s66, 0
      %s69 = sadd.s32 %s68, 1
      %s70 = scalar_select %p67, %s68, %s69
      %p73 = pneg %p67
      %p74 = scmp.eq.s32.totalorder %s11, 1
      %p75 = por %p73, %p74
      %p76 = scmp.ne.s32.totalorder %s68, %s71
      %p77 = scmp.eq.s32.totalorder %s11, 0
      %p78 = por %p76, %p77
      %p79 = scmp.ne.s32.totalorder %s68, %s71
      %p80 = scmp.eq.s32.totalorder %s16, 1
      %p81 = por %p79, %p80
      %p82 = scmp.ne.s32.totalorder %s71, %s72
      %p83 = scmp.eq.s32.totalorder %s16, 0
      %p84 = por %p82, %p83
      %p85 = scmp.ne.s32.totalorder %s71, %s72
      %p86 = scmp.eq.s32.totalorder %s17, 1
      %p87 = por %p85, %p86
      %p89 = scmp.ne.s32.totalorder %s72, %s88
      %p90 = scmp.eq.s32.totalorder %s17, 0
      %p91 = por %p89, %p90
      %p92 = scmp.le.s32.totalorder 1, %s11
      %p93 = scmp.lt.s32.totalorder %s11, 3
      %p94 = pnand %p92, %p93
      %p95 = pneg %p94
      // Predicated region
      $region9: #{tpu_custom_call.1} parent=5 // pred_check
        _
      $region10: #{tpu_custom_call.1} parent=5 // pred_check_branch
        %97 = sbr.rel (%p94) target = $region12
      $region11: #{tpu_custom_call.1} parent=5 // pred_region
        %s98 = ssub.s32 %s11, 1
        // Predicated region
        $region13: #{tpu_custom_call.1} parent=11 // pred_check
          %p99 = pneg %p58
        $region14: #{tpu_custom_call.1} parent=11 // pred_check_branch
          %101 = sbr.rel (%p99) target = $region16
        $region15: #{tpu_custom_call.1} parent=11 // pred_region
          _
        $region16: #{tpu_custom_call.1} parent=11 // pred_fallthru
          _
      $region12: #{tpu_custom_call.1} parent=5 // pred_fallthru
        _
      %p102 = scmp.lt.s32.totalorder %s11, 2
      // Predicated region
      $region17: #{tpu_custom_call.1} parent=5 // pred_check
        %p103 = pneg %p102
      $region18: #{tpu_custom_call.1} parent=5 // pred_check_branch
        %105 = sbr.rel (%p103) target = $region20
      $region19: #{tpu_custom_call.1} parent=5 // pred_region
        // Predicated region
        $region21: #{tpu_custom_call.1} parent=19 // pred_check
          %p106 = pneg %p31
        $region22: #{tpu_custom_call.1} parent=19 // pred_check_branch
          %108 = sbr.rel (%p106) target = $region24
        $region23: #{tpu_custom_call.1} parent=19 // pred_region
          %p109 = scmp.lt.s32.totalorder %s11, 1
          %s110 = scalar_select %p109, %s11, 1
          %s111 = smul.addr %s110, 8
          %s112 = scalar_lea.vmem %s0, %s111
        $region24: #{tpu_custom_call.1} parent=19 // pred_fallthru
          _
      $region20: #{tpu_custom_call.1} parent=5 // pred_fallthru
        _
      %p113 = scmp.le.s32.totalorder 1, %s11
      %p114 = scmp.lt.s32.totalorder %s11, 3
      %p115 = pnand %p113, %p114
      %p116 = pneg %p115
      // Predicated region
      $region25: #{tpu_custom_call.1} parent=5 // pred_check
        _
      $region26: #{tpu_custom_call.1} parent=5 // pred_check_branch
        %118 = sbr.rel (%p115) target = $region28
      $region27: #{tpu_custom_call.1} parent=5 // pred_region
        %s119 = ssub.s32 %s11, 1
        %p120 = scmp.lt.s32.totalorder %s16, 1
        %s121 = scalar_select %p120, %s16, 1
        %s122 = smul.addr %s121, 8
        %s123 = scalar_lea.vmem %s0, %s122
        %p124 = pneg %p37
        %p125 = pneg %p34
        %p126 = pneg %p58
        %p127 = pneg %p55
        %p128 = pneg %p84
        %p129 = pneg %p81
        %s130 = sand.u32 %s71, 1
        %s131 = scalar_lea.sflag [#allocation3], %s130
        %s132 = sand.u32 %s71, 1
        %s133 = smul.addr %s132, 8
        %s134 = scalar_lea.vmem [#allocation2], %s133
        %p135 = scmp.lt.s32.totalorder %s16, 1
        %s136 = scalar_select %p135, %s16, 1
        %s137 = smul.addr %s136, 8
        %s138 = scalar_lea.vmem %s0, %s137
        %v139 = vld [vmem:[%s138] sm:$0xff]
        %v140 = vld [vmem:[%s1] sm:$0xff]
        %v141 = vld [vmem:[%s1 + $0x8] sm:$0xff]
        %v142 = vld [vmem:[%s1 + $0x10] sm:$0xff]
        %v143 = vld [vmem:[%s1 + $0x18] sm:$0xff]
        %v144 = vld [vmem:[%s1 + $0x20] sm:$0xff]
        %v145 = vld [vmem:[%s1 + $0x28] sm:$0xff]
        %v146 = vld [vmem:[%s1 + $0x30] sm:$0xff]
        %v147 = vld [vmem:[%s1 + $0x38] sm:$0xff]
        %vm148 = vcmask 523264
        %v150 = vsel %vm148, %v139, 0
        %152 = vmatprep.subr.mxu0 0.0
        %153 = vmatpush1.msra.mxu0 %v140
        %154 = vmatprep.subr.mxu0 0.0
        %155 = vmatpush1.msra.mxu0 %v141
        %156 = vmatprep.subr.mxu0 0.0
        %157 = vmatpush1.msra.mxu0 %v142
        %158 = vmatprep.subr.mxu0 0.0
        %159 = vmatpush1.msra.mxu0 %v143
        %160 = vmatprep.subr.mxu0 0.0
        %161 = vmatpush1.msra.mxu0 %v144
        %162 = vmatprep.subr.mxu0 0.0
        %163 = vmatpush1.msra.mxu0 %v145
        %164 = vmatprep.subr.mxu0 0.0
        %165 = vmatpush1.msra.mxu0 %v146
        %166 = vmatprep.subr.mxu0 0.0
        %167 = vmatpush1.msra.mxu0 %v147
        %168 = vmatprep.subr.mxu0 0.0
        %169 = vmatpush1.msra.mxu0 0.0
        %170 = vmatprep.subr.mxu0 0.0
        %171 = vmatpush1.msra.mxu0 0.0
        %172 = vmatprep.subr.mxu0 0.0
        %173 = vmatpush1.msra.mxu0 0.0
        %174 = vmatprep.subr.mxu0 0.0
        %175 = vmatpush1.msra.mxu0 0.0
        %176 = vmatprep.subr.mxu0 0.0
        %177 = vmatpush1.msra.mxu0 0.0
        %178 = vmatprep.subr.mxu0 0.0
        %179 = vmatpush1.msra.mxu0 0.0
        %180 = vmatprep.subr.mxu0 0.0
        %181 = vmatpush1.msra.mxu0 0.0
        %182 = vmatprep.subr.mxu0 0.0
        %183 = vmatpush1.msra.mxu0 0.0
        %184 = vmatprep.subr.mxu0 0.0
        %185 = vmatpush1.msra.mxu0 0.0
        %186 = vmatprep.subr.mxu0 0.0
        %187 = vmatpush1.msra.mxu0 0.0
        %188 = vmatprep.subr.mxu0 0.0
        %189 = vmatpush1.msra.mxu0 0.0
        %190 = vmatprep.subr.mxu0 0.0
        %191 = vmatpush1.msra.mxu0 0.0
        %192 = vmatprep.subr.mxu0 0.0
        %193 = vmatpush1.msra.mxu0 0.0
        %194 = vmatprep.subr.mxu0 0.0
        %195 = vmatpush1.msra.mxu0 0.0
        %196 = vmatprep.subr.mxu0 0.0
        %197 = vmatpush1.msra.mxu0 0.0
        %198 = vmatprep.subr.mxu0 0.0
        %199 = vmatpush1.msra.mxu0 0.0
        %200 = vmatprep.subr.mxu0 0.0
        %201 = vmatpush1.msra.mxu0 0.0
        %202 = vmatprep.subr.mxu0 0.0
        %203 = vmatpush1.msra.mxu0 0.0
        %204 = vmatprep.subr.mxu0 0.0
        %205 = vmatpush1.msra.mxu0 0.0
        %206 = vmatprep.subr.mxu0 0.0
        %207 = vmatpush1.msra.mxu0 0.0
        %208 = vmatprep.subr.mxu0 0.0
        %209 = vmatpush1.msra.mxu0 0.0
        %210 = vmatprep.subr.mxu0 0.0
        %211 = vmatpush1.msra.mxu0 0.0
        %212 = vmatprep.subr.mxu0 0.0
        %213 = vmatpush1.msra.mxu0 0.0
        %214 = vmatprep.subr.mxu0 0.0
        %215 = vmatpush1.msra.mxu0 0.0
        %216 = vmatprep.mubr.f32.mxu0 0.0
        %217 = vmatmul.mubr.f32.gmra.mrb[0].mxu0 %v150
        %v218 = vpop.f32.mrb[0].mxu0
        %v219 = vadd.f32 0.0, %v218
        %v220 = vpop.f32.mrb[0].mxu0
        %221 = vdwg.mxu0
        %223 = vrot.lane.b32.xlu0 %v219, 112
        %v224 = vpop.permute.xlu0 %223
        %vm225 = vcmask 130048
        %v226 = vsel %vm225, %v224, 0
        %v228 = vsel %vm225, %v219, 0
        %230 = vmatprep.subr.mxu0 0.0
        %231 = vmatpush1.xpose.msra.mxu0 %v228
        %232 = vmatprep.subr.mxu0 0.0
        %233 = vmatpush1.xpose.msra.mxu0 0.0
        %234 = vmatprep.subr.mxu0 0.0
        %235 = vmatpush1.xpose.msra.mxu0 0.0
        %236 = vmatprep.subr.mxu0 0.0
        %237 = vmatpush1.xpose.msra.mxu0 0.0
        %238 = vmatprep.subr.mxu0 0.0
        %239 = vmatpush1.xpose.msra.mxu0 0.0
        %240 = vmatprep.subr.mxu0 0.0
        %241 = vmatpush1.xpose.msra.mxu0 0.0
        %242 = vmatprep.subr.mxu0 0.0
        %243 = vmatpush1.xpose.msra.mxu0 0.0
        %244 = vmatprep.subr.mxu0 0.0
        %245 = vmatpush1.xpose.msra.mxu0 0.0
        %246 = vmatprep.subr.mxu0 0.0
        %247 = vmatpush1.xpose.msra.mxu0 0.0
        %248 = vmatprep.subr.mxu0 0.0
        %249 = vmatpush1.xpose.msra.mxu0 0.0
        %250 = vmatprep.subr.mxu0 0.0
        %251 = vmatpush1.xpose.msra.mxu0 0.0
        %252 = vmatprep.subr.mxu0 0.0
        %253 = vmatpush1.xpose.msra.mxu0 0.0
        %254 = vmatprep.subr.mxu0 0.0
        %255 = vmatpush1.xpose.msra.mxu0 0.0
        %256 = vmatprep.subr.mxu0 0.0
        %257 = vmatpush1.xpose.msra.mxu0 0.0
        %258 = vmatprep.subr.mxu0 0.0
        %259 = vmatpush1.xpose.msra.mxu0 0.0
        %260 = vmatprep.subr.mxu0 0.0
        %261 = vmatpush1.xpose.msra.mxu0 0.0
        %262 = vmatprep.subr.mxu0 0.0
        %263 = vmatpush1.xpose.msra.mxu0 0.0
        %264 = vmatprep.subr.mxu0 0.0
        %265 = vmatpush1.xpose.msra.mxu0 0.0
        %266 = vmatprep.subr.mxu0 0.0
        %267 = vmatpush1.xpose.msra.mxu0 0.0
        %268 = vmatprep.subr.mxu0 0.0
        %269 = vmatpush1.xpose.msra.mxu0 0.0
        %270 = vmatprep.subr.mxu0 0.0
        %271 = vmatpush1.xpose.msra.mxu0 0.0
        %272 = vmatprep.subr.mxu0 0.0
        %273 = vmatpush1.xpose.msra.mxu0 0.0
        %274 = vmatprep.subr.mxu0 0.0
        %275 = vmatpush1.xpose.msra.mxu0 0.0
        %276 = vmatprep.subr.mxu0 0.0
        %277 = vmatpush1.xpose.msra.mxu0 0.0
        %278 = vmatprep.subr.mxu0 0.0
        %279 = vmatpush1.xpose.msra.mxu0 0.0
        %280 = vmatprep.subr.mxu0 0.0
        %281 = vmatpush1.xpose.msra.mxu0 0.0
        %282 = vmatprep.subr.mxu0 0.0
        %283 = vmatpush1.xpose.msra.mxu0 0.0
        %284 = vmatprep.subr.mxu0 0.0
        %285 = vmatpush1.xpose.msra.mxu0 0.0
        %286 = vmatprep.subr.mxu0 0.0
        %287 = vmatpush1.xpose.msra.mxu0 0.0
        %288 = vmatprep.subr.mxu0 0.0
        %289 = vmatpush1.xpose.msra.mxu0 0.0
        %290 = vmatprep.subr.mxu0 0.0
        %291 = vmatpush1.xpose.msra.mxu0 0.0
        %292 = vmatprep.subr.mxu0 0.0
        %293 = vmatpush1.xpose.msra.mxu0 0.0
        %294 = vmatprep.mubr.f32.mxu0 0.0
        %295 = vmatmul.mubr.f32.gmra.mrb[0].mxu0 %v226
        %v296 = vpop.f32.mrb[0].mxu0
        %v297 = vadd.f32 0.0, %v296
        %v298 = vpop.f32.mrb[0].mxu0
        %299 = vdwg.mxu0
        %v300 = vmul.f32 %v297, 0.125
        %v301 = vlaneseq
        %v302 = vshrl.u32 %v301, 7
        %v303 = vlaneseq
        %v304 = vand.u32 %v303, 127
        %vm305 = vcmp.le.s32.totalorder %v304, %v302
        %v306 = vsel %vm305, %v300, -inf
        %vm307 = vcmask 64512
        %v308 = vsel %vm307, %v306, -inf
        %309 = vmax.xlane.f32.xlu0 %v308
        %v310 = vpop.xlane.xlu0 %309
        %v311 = vsub.f32 %v306, %v310
        %v312 = vmul.f32 %v311, 1.442695
        %v313 = vpow.pop %v312
        %v314 = vsel %vm307, %v313, 0.0
        %315 = vadd.xlane.f32.xlu0 %v314
        %v316 = vpop.xlane.xlu0 %315
        %v317 = vrcp.pop %v316
        %v318 = vmul.f32 %v313, %v317
        %319 = vrot.lane.b32.xlu0 %v219, 96
        %v320 = vpop.permute.xlu0 %319
        %v323 = vsel %vm307, %v318, 0
        %325 = vmatprep.subr.mxu0 0.0
        %326 = vmatpush1.msra.mxu0 %v320
        %327 = vmatprep.subr.mxu0 0.0
        %328 = vmatpush1.msra.mxu0 0.0
        %329 = vmatprep.subr.mxu0 0.0
        %330 = vmatpush1.msra.mxu0 0.0
        %331 = vmatprep.subr.mxu0 0.0
        %332 = vmatpush1.msra.mxu0 0.0
        %333 = vmatprep.subr.mxu0 0.0
        %334 = vmatpush1.msra.mxu0 0.0
        %335 = vmatprep.subr.mxu0 0.0
        %336 = vmatpush1.msra.mxu0 0.0
        %337 = vmatprep.subr.mxu0 0.0
        %338 = vmatpush1.msra.mxu0 0.0
        %339 = vmatprep.subr.mxu0 0.0
        %340 = vmatpush1.msra.mxu0 0.0
        %341 = vmatprep.subr.mxu0 0.0
        %342 = vmatpush1.msra.mxu0 0.0
        %343 = vmatprep.subr.mxu0 0.0
        %344 = vmatpush1.msra.mxu0 0.0
        %345 = vmatprep.subr.mxu0 0.0
        %346 = vmatpush1.msra.mxu0 0.0
        %347 = vmatprep.subr.mxu0 0.0
        %348 = vmatpush1.msra.mxu0 0.0
        %349 = vmatprep.subr.mxu0 0.0
        %350 = vmatpush1.msra.mxu0 0.0
        %351 = vmatprep.subr.mxu0 0.0
        %352 = vmatpush1.msra.mxu0 0.0
        %353 = vmatprep.subr.mxu0 0.0
        %354 = vmatpush1.msra.mxu0 0.0
        %355 = vmatprep.subr.mxu0 0.0
        %356 = vmatpush1.msra.mxu0 0.0
        %357 = vmatprep.subr.mxu0 0.0
        %358 = vmatpush1.msra.mxu0 0.0
        %359 = vmatprep.subr.mxu0 0.0
        %360 = vmatpush1.msra.mxu0 0.0
        %361 = vmatprep.subr.mxu0 0.0
        %362 = vmatpush1.msra.mxu0 0.0
        %363 = vmatprep.subr.mxu0 0.0
        %364 = vmatpush1.msra.mxu0 0.0
        %365 = vmatprep.subr.mxu0 0.0
        %366 = vmatpush1.msra.mxu0 0.0
        %367 = vmatprep.subr.mxu0 0.0
        %368 = vmatpush1.msra.mxu0 0.0
        %369 = vmatprep.subr.mxu0 0.0
        %370 = vmatpush1.msra.mxu0 0.0
        %371 = vmatprep.subr.mxu0 0.0
        %372 = vmatpush1.msra.mxu0 0.0
        %373 = vmatprep.subr.mxu0 0.0
        %374 = vmatpush1.msra.mxu0 0.0
        %375 = vmatprep.subr.mxu0 0.0
        %376 = vmatpush1.msra.mxu0 0.0
        %377 = vmatprep.subr.mxu0 0.0
        %378 = vmatpush1.msra.mxu0 0.0
        %379 = vmatprep.subr.mxu0 0.0
        %380 = vmatpush1.msra.mxu0 0.0
        %381 = vmatprep.subr.mxu0 0.0
        %382 = vmatpush1.msra.mxu0 0.0
        %383 = vmatprep.subr.mxu0 0.0
        %384 = vmatpush1.msra.mxu0 0.0
        %385 = vmatprep.subr.mxu0 0.0
        %386 = vmatpush1.msra.mxu0 0.0
        %387 = vmatprep.subr.mxu0 0.0
        %388 = vmatpush1.msra.mxu0 0.0
        %389 = vmatprep.mubr.f32.mxu0 0.0
        %390 = vmatmul.mubr.f32.gmra.mrb[0].mxu0 %v323
        %v391 = vpop.f32.mrb[0].mxu0
        %v392 = vadd.f32 0.0, %v391
        %v393 = vpop.f32.mrb[0].mxu0
        %394 = vdwg.mxu0
        %395 = vst.msk [vmem:[%s134] sm:$0xff] %vm225, %v392
        %s396 = sand.u32 %s71, 1
        %s397 = scalar_lea.sflag [#allocation3], %s396
        %s398 = sand.u32 %s71, 1
        %s399 = smul.addr %s398, 8
        %s400 = scalar_lea.vmem [#allocation2], %s399
        // Predicated region
        $region29: #{tpu_custom_call.1} parent=27 // pred_check
          %p401 = pneg %p81
        $region30: #{tpu_custom_call.1} parent=27 // pred_check_branch
          %403 = sbr.rel (%p401) target = $region32
        $region31: #{tpu_custom_call.1} parent=27 // pred_region
          %s405 = ssub.s32 128, 128
          %406 = vsyncadd %s397, %s405
          %s407 = smul.addr %s16, 128
          %s408 = scalar_lea.hbm %s2, %s407
          %s410 = sshll.u32 %s400, 4
          %s411 = int_to_ptr.vmem [resolvable:$true] %s410
          %413 = dma.vmem_to_hbm [thread:$0]  %s411, 128, %s408, %s397
        $region32: #{tpu_custom_call.1} parent=27 // pred_fallthru
          _
      $region28: #{tpu_custom_call.1} parent=5 // pred_fallthru
        _
      %p414 = scmp.le.s32.totalorder 2, %s11
      // Predicated region
      $region33: #{tpu_custom_call.1} parent=5 // pred_check
        %p415 = pneg %p414
      $region34: #{tpu_custom_call.1} parent=5 // pred_check_branch
        %417 = sbr.rel (%p415) target = $region36
      $region35: #{tpu_custom_call.1} parent=5 // pred_region
        %s418 = ssub.s32 %s11, 2
        // Predicated region
        $region37: #{tpu_custom_call.1} parent=35 // pred_check
          %p419 = pneg %p87
        $region38: #{tpu_custom_call.1} parent=35 // pred_check_branch
          %421 = sbr.rel (%p419) target = $region40
        $region39: #{tpu_custom_call.1} parent=35 // pred_region
          %s422 = sand.u32 %s72, 1
          %s423 = scalar_lea.sflag [#allocation3], %s422
          %s424 = sand.u32 %s72, 1
          %s425 = smul.addr %s424, 8
          %s426 = scalar_lea.vmem [#allocation2], %s425
          %427 = dma.done %s423, 128
        $region40: #{tpu_custom_call.1} parent=35 // pred_fallthru
          _
      $region36: #{tpu_custom_call.1} parent=5 // pred_fallthru
        _
    $region6: #{tpu_custom_call.1} parent=1 // loop_footer
      %s15 = sadd.s32 1, %s11
    $region7: #{tpu_custom_call.1} parent=1 // loop_footer_branch
      %10 = sbr.rel target = $region3
    $region8: #{tpu_custom_call.1} parent=1 // loop_exit
      _
    %428 = vsyncpa [#allocation3], 1
    %s429 = scalar_lea.sflag [#allocation3], 1
    %430 = vsyncpa %s429, 1

</llo_original>
